<compile_context>
chip_gen: v7x
topology: tpu7x:2x2x1
jax: 0.10.0
libtpu: 0.0.40
codegen_flags: <defaults>
</compile_context>

<pallas_src>
import numpy as np
import jax
import jax.numpy as jnp
from jax.experimental import pallas as pl
from jax.experimental.pallas import tpu as pltpu


def _round_up(x, m):
    return ((x + m - 1) // m) * m


def _build_selection_matrix(src_hw, Ht, Wt, K_pad, HWt_pad, dtype):
    """Stacked one-hot selection matrix R (K_pad, HWt_pad).

    Row block i covers source i's flattened (Hs*Ws) pixels; R[k, t] = 1 iff
    flattened source pixel k is the PyTorch 'nearest' source of flattened
    target pixel t.  Padding rows / columns stay zero.
    """
    HWt = Ht * Wt
    R = np.zeros((K_pad, HWt_pad), dtype=np.float32)
    cols = np.arange(HWt)
    off = 0
    for (Hs, Ws) in src_hw:
        hi = (np.arange(Ht) * Hs) // Ht          # floor(dst * in / out) == PyTorch 'nearest'
        wi = (np.arange(Wt) * Ws) // Wt
        src = (hi[:, None] * Ws + wi[None, :]).reshape(-1)
        R[off + src, cols] = 1.0
        off += Hs * Ws
    return R.astype(dtype)


def _vmem_budget_bytes():
    cap = 64 << 20                               # conservative fallback: v7x per-core VMEM
    try:
        cap = int(pltpu.get_tpu_info().vmem_capacity_bytes)
    except Exception:
        pass
    # ~80% of capacity (hard-capped) leaves headroom for Mosaic internal scratch:
    # ~52 MiB on v7x, ~105 MiB on v5e/v6e.
    return int(min(cap * 0.8, 110 << 20))


def _choose_tiles(B, K_pad, HWt_pad, itemsize, budget):
    """Pick (TB, TN): as large as fits the budget, sublane/lane aligned."""
    align = max(8, 32 // itemsize)               # sublane packing: 8 f32, 16 bf16, 32 int8
    # R column slab (double-buffered) gets at most ~40% of the budget.
    tn_cap = (int(budget * 0.4) // max(1, 2 * K_pad * itemsize) // 128) * 128
    TN = min(HWt_pad, max(128, tn_cap))
    # Remaining budget: x block (2x), last + out blocks (2x each), f32 temp.
    remaining = budget - 2 * K_pad * TN * itemsize
    per_row = 2 * K_pad * itemsize + 4 * TN * itemsize + 4 * TN
    tb = max(1, remaining // max(1, per_row))
    if tb >= B:
        TB = B                                   # full array dim is always legal
    else:
        TB = min(B, max(align, (tb // align) * align))
    # Megacore / v7x: prefer >= 2 grid steps when the problem is big enough.
    if TB >= B and HWt_pad <= TN and B >= 2 * align:
        TB = min(B, _round_up(-(-B // 2), align))
    return TB, TN


def cbfuse_pallas(sources, last, vmem_budget=None):
    """sources: list of (N, C, Hs_i, Ws_i); last: (N, C, Ht, Wt) -> (N, C, Ht, Wt)."""
    N, C, Ht, Wt = (int(d) for d in last.shape)
    dtype = last.dtype
    if not sources:
        return last
    B = N * C
    HWt = Ht * Wt
    HWt_pad = _round_up(HWt, 128)
    itemsize = np.dtype(dtype).itemsize

    src_hw = [(int(s.shape[2]), int(s.shape[3])) for s in sources]
    K_total = sum(h * w for h, w in src_hw)
    K_pad = _round_up(K_total, 128)

    # --- host-side prep: lane-aligned concatenated sources + padded last ---
    x_parts = [s.astype(dtype).reshape(B, h * w) for s, (h, w) in zip(sources, src_hw)]
    x_cat = x_parts[0] if len(x_parts) == 1 else jnp.concatenate(x_parts, axis=1)
    if K_pad > K_total:
        x_cat = jnp.pad(x_cat, ((0, 0), (0, K_pad - K_total)))
    last_flat = last.reshape(B, HWt)
    if HWt_pad > HWt:
        last_flat = jnp.pad(last_flat, ((0, 0), (0, HWt_pad - HWt)))
    R = jnp.asarray(_build_selection_matrix(src_hw, Ht, Wt, K_pad, HWt_pad, dtype))

    budget = int(vmem_budget) if vmem_budget is not None else _vmem_budget_bytes()
    slack = 2 << 20
    TB, TN = _choose_tiles(B, K_pad, HWt_pad, itemsize, max(budget - slack, 1 << 20))
    num_b = pl.cdiv(B, TB)
    num_j = pl.cdiv(HWt_pad, TN)

    # f32: multi-pass exact matmul so the one-hot selection reproduces x bit-exactly.
    precision = (jax.lax.Precision.HIGHEST if dtype == jnp.float32
                 else jax.lax.Precision.DEFAULT)

    def kernel(x_ref, r_ref, last_ref, out_ref):
        acc = jnp.dot(x_ref[...], r_ref[...],
                      preferred_element_type=jnp.float32,
                      precision=precision)
        out_ref[...] = (acc + last_ref[...].astype(jnp.float32)).astype(out_ref.dtype)

    # Budget actually used by the chosen tiles (dbl-buffered blocks + f32 temp + slack).
    vmem_needed = ((2 * TB * K_pad + 2 * K_pad * TN + 4 * TB * TN) * itemsize
                   + 4 * TB * TN + slack)
    vmem_limit = int(min(max(vmem_needed, 32 << 20), 110 << 20))

    out_flat = pl.pallas_call(
        kernel,
        out_shape=jax.ShapeDtypeStruct((B, HWt_pad), dtype),
        grid=(num_j, num_b),                                   # j outer: R slab DMA'd once
        in_specs=[
            pl.BlockSpec((TB, K_pad), lambda j, b: (b, 0)),    # concatenated sources
            pl.BlockSpec((K_pad, TN), lambda j, b: (0, j)),    # selection matrix slab
            pl.BlockSpec((TB, TN), lambda j, b: (b, j)),       # last feature map
        ],
        out_specs=pl.BlockSpec((TB, TN), lambda j, b: (b, j)),
        compiler_params=pltpu.CompilerParams(
            dimension_semantics=("parallel", "parallel"),
            vmem_limit_bytes=vmem_limit),
    )(x_cat, R, last_flat)

    if HWt_pad > HWt:
        out_flat = out_flat[:, :HWt]
    return out_flat.reshape(N, C, Ht, Wt)


def cbfuse_forward(idx, xs):
    """Mirror of CBFuse.forward: xs[:-1] are lists of feature maps, xs[-1] is a tensor."""
    sources = [x[idx[i]] for i, x in enumerate(xs[:-1])]
    return cbfuse_pallas(sources, xs[-1])


def cbfuse_reference(idx, xs):
    """Pure-JAX reference (nearest interpolate + sum), for verification."""
    last = xs[-1]
    Ht, Wt = last.shape[2:]
    out = last.astype(jnp.float32)
    for i, x in enumerate(xs[:-1]):
        s = x[idx[i]].astype(jnp.float32)
        Hs, Ws = s.shape[2:]
        hi = (jnp.arange(Ht) * Hs) // Ht
        wi = (jnp.arange(Wt) * Ws) // Wt
        out = out + s[:, :, hi][:, :, :, wi]
    return out.astype(last.dtype)


if __name__ == "__main__":
    key = jax.random.PRNGKey(0)
    k = jax.random.split(key, 12)

    # --- test 1: GELAN-style CBFuse, f32, includes non-integer scale (16/6) ---
    N, C, Ht, Wt = 2, 4, 16, 16
    list0 = [jax.random.normal(k[0], (N, C, 4, 4), jnp.float32),
             jax.random.normal(k[1], (N, C, 8, 8), jnp.float32)]
    list1 = [jax.random.normal(k[2], (N, C, 8, 8), jnp.float32),
             jax.random.normal(k[3], (N, C, 6, 6), jnp.float32)]
    last = jax.random.normal(k[4], (N, C, Ht, Wt), jnp.float32)
    idx = [0, 1]
    xs = [list0, list1, last]
    out = jax.block_until_ready(cbfuse_forward(idx, xs))
    ref = cbfuse_reference(idx, xs)
    assert out.shape == (N, C, Ht, Wt)
    np.testing.assert_allclose(np.asarray(out), np.asarray(ref), rtol=1e-5, atol=1e-5)

    # --- test 2: non-128-multiple target (20x20 -> padded to 512); tiny forced
    #     VMEM budgets exercise (a) a split/partial B axis and (b) a tiled /
    #     partial output-spatial axis ---
    N2, C2, Ht2, Wt2 = 2, 10, 20, 20
    srcs2 = [jax.random.normal(k[5], (N2, C2, 5, 5), jnp.float32),
             jax.random.normal(k[6], (N2, C2, 10, 10), jnp.float32)]
    last2 = jax.random.normal(k[7], (N2, C2, Ht2, Wt2), jnp.float32)
    ref2 = cbfuse_reference([0, 0], [[srcs2[0]], [srcs2[1]], last2])
    for forced_budget in (6 << 20, 2_500_000):
        out2 = jax.block_until_ready(cbfuse_pallas(srcs2, last2, vmem_budget=forced_budget))
        np.testing.assert_allclose(np.asarray(out2), np.asarray(ref2), rtol=1e-5, atol=1e-5)

    # --- test 3: bf16 end-to-end (sublane alignment 16, >=2-step parallel grid) ---
    srcs3 = [jax.random.normal(k[8], (2, 16, 8, 8), jnp.bfloat16)]
    last3 = jax.random.normal(k[9], (2, 16, 16, 16), jnp.bfloat16)
    out3 = jax.block_until_ready(cbfuse_pallas(srcs3, last3))
    ref3 = cbfuse_reference([0], [[srcs3[0]], last3])
    np.testing.assert_allclose(np.asarray(out3, dtype=np.float32),
                               np.asarray(ref3, dtype=np.float32),
                               rtol=2e-2, atol=2e-2)

    print("KERNEL_OK")
</pallas_src>

<mosaic_0001>
module attributes {stable_mosaic.version = 11 : i64} {
  func.func @kernel(%arg0: i32, %arg1: i32, %arg2: memref<8x128xf32, #tpu.memory_space<vmem>>, %arg3: memref<128x256xf32, #tpu.memory_space<vmem>>, %arg4: memref<8x256xf32, #tpu.memory_space<vmem>>, %arg5: memref<8x256xf32, #tpu.memory_space<vmem>>) attributes {dimension_semantics = [#tpu.dimension_semantics<parallel>, #tpu.dimension_semantics<parallel>], iteration_bounds = array<i64: 1, 1>, scalar_prefetch = 0 : i64, scratch_operands = 0 : i64, tpu.core_type = #tpu.core_type<tc>, window_params = [{transform_indices = @transform_0, window_bounds = array<i64: 8, 128>}, {transform_indices = @transform_1, window_bounds = array<i64: 128, 256>}, {transform_indices = @transform_2, window_bounds = array<i64: 8, 256>}, {transform_indices = @transform_3, window_bounds = array<i64: 8, 256>}]} {
    %c0 = arith.constant 0 : index
    %c0_0 = arith.constant 0 : index
    %0 = vector.load %arg2[%c0, %c0_0] : memref<8x128xf32, #tpu.memory_space<vmem>>, vector<8x128xf32>
    %c0_1 = arith.constant 0 : index
    %c0_2 = arith.constant 0 : index
    %1 = vector.load %arg3[%c0_1, %c0_2] : memref<128x256xf32, #tpu.memory_space<vmem>>, vector<128x256xf32>
    %cst = arith.constant dense<0.000000e+00> : vector<8x256xf32>
    %2 = tpu.matmul %0, %1, %cst {dimension_numbers = #tpu.dot_dimension_numbers<[1], [0], [0], [1], [0, 0, 1, 1], [], []>, precision = #tpu.contract_precision<fp32>} : vector<8x128xf32>, vector<128x256xf32>, vector<8x256xf32> -> vector<8x256xf32>
    %c0_3 = arith.constant 0 : index
    %c0_4 = arith.constant 0 : index
    %3 = vector.load %arg4[%c0_3, %c0_4] : memref<8x256xf32, #tpu.memory_space<vmem>>, vector<8x256xf32>
    %4 = arith.addf %2, %3 : vector<8x256xf32>
    %c0_5 = arith.constant 0 : index
    %c0_6 = arith.constant 0 : index
    %5 = vector.load %arg5[%c0_5, %c0_6] : memref<8x256xf32, #tpu.memory_space<vmem>>, vector<8x256xf32>
    tpu.vector_store %arg5[%c0_5, %c0_6], %4 {strides = array<i32>} : memref<8x256xf32, #tpu.memory_space<vmem>>, vector<8x256xf32>,
    return
  }
  func.func @transform_0(%arg0: i32, %arg1: i32) -> (i32, i32) {
    %c0_i32 = arith.constant 0 : i32
    %c0_i32_0 = arith.constant 0 : i32
    return %arg1, %c0_i32 : i32, i32
  }
  func.func @transform_1(%arg0: i32, %arg1: i32) -> (i32, i32) {
    %c0_i32 = arith.constant 0 : i32
    %c0_i32_0 = arith.constant 0 : i32
    return %c0_i32, %arg0 : i32, i32
  }
  func.func @transform_2(%arg0: i32, %arg1: i32) -> (i32, i32) {
    %c0_i32 = arith.constant 0 : i32
    return %arg1, %arg0 : i32, i32
  }
  func.func @transform_3(%arg0: i32, %arg1: i32) -> (i32, i32) {
    %c0_i32 = arith.constant 0 : i32
    return %arg1, %arg0 : i32, i32
  }
}

</mosaic_0001>

<llo_original>
// kernel: tpu_custom_call.1
$region0: #{tpu_custom_call.1}
  #allocation0 [shape = 'u32[]', space=smem, size = 0x4, offset = 0x4, fixed_abs, tag = 'smem constant byte address 0x4 - core index']
  #allocation1 [shape = 'u32[144,128]{1,0:T(1,128)}', space=vmem, size = 0x12000, scoped, tag = 'internal scratch']
  %s0 = inlined_call_operand.hbm [shape: f32[8,128], index: 0, kind: input, shape index: {}]
  %s1 = inlined_call_operand.hbm [shape: f32[128,256], index: 1, kind: input, shape index: {}]
  %s2 = inlined_call_operand.hbm [shape: f32[8,256], index: 2, kind: input, shape index: {}]
  %s3 = inlined_call_operand.hbm [shape: f32[8,256], index: 3, kind: output, shape index: {}]
  %s4 = sld [smem:[#allocation0]]
  $region34: #{tpu_custom_call.1} parent=0
    _
  %s6 = ssub.s32 1, %s4
  %s7 = scalar_select 0, %s6, %s4
  $region1: #{tpu_custom_call.1} parent=0
    #allocation2 [shape = 'u8[4096]{0}', space=vmem, size = 0x1000, scoped, tag = 'input window, operand 0, single buffered']
    #allocation3 [shape = 's32[1]{0}', space=sflag, size = 0x4, scoped, tag = 'scoped memory for tpu_custom_call.1']
    #allocation4 [shape = 's32[1]{0}', space=sflag, size = 0x4, scoped, tag = 'scoped memory for tpu_custom_call.1']
    #allocation5 [shape = 'u8[131072]{0}', space=vmem, size = 0x20000, scoped, tag = 'input window, operand 1, single buffered']
    #allocation6 [shape = 's32[1]{0}', space=sflag, size = 0x4, scoped, tag = 'scoped memory for tpu_custom_call.1']
    #allocation7 [shape = 'u8[8192]{0}', space=vmem, size = 0x2000, scoped, tag = 'input window, operand 2, single buffered']
    #allocation8 [shape = 'u8[8192]{0}', space=vmem, size = 0x2000, scoped, tag = 'output window, operand 0, single buffered']
    %8 = vsyncpa [#allocation3], 0
    %9 = vsyncpa [#allocation6], 0
    %10 = vsyncpa [#allocation4], 0
    // Predicated region
    $region2: #{tpu_custom_call.1} parent=1 // pred_check
      _
    $region3: #{tpu_custom_call.1} parent=1 // pred_check_branch
      %12 = sbr.rel (0) target = $region5
    $region4: #{tpu_custom_call.1} parent=1 // pred_region
      %s14 = ssub.s32 128, 128
      %15 = vsyncadd [#allocation3], %s14
      %s17 = sshll.u32 [#allocation2], 4
      %s18 = int_to_ptr.vmem [resolvable:$true] %s17
      %20 = dma.hbm_to_vmem [thread:$0]  %s0, 128, %s18, [#allocation3]
    $region5: #{tpu_custom_call.1} parent=1 // pred_fallthru
      _
    // Predicated region
    $region6: #{tpu_custom_call.1} parent=1 // pred_check
      _
    $region7: #{tpu_custom_call.1} parent=1 // pred_check_branch
      %22 = sbr.rel (0) target = $region9
    $region8: #{tpu_custom_call.1} parent=1 // pred_region
      %s24 = ssub.s32 4096, 4096
      %25 = vsyncadd [#allocation6], %s24
      %s26 = sshll.u32 [#allocation5], 4
      %s27 = int_to_ptr.vmem [resolvable:$true] %s26
      %32 = dma.hbm_to_vmem [thread:$0]  %s1, 4096, %s27, [#allocation6], 256, 256, 16
    $region9: #{tpu_custom_call.1} parent=1 // pred_fallthru
      _
    // Predicated region
    $region10: #{tpu_custom_call.1} parent=1 // pred_check
      _
    $region11: #{tpu_custom_call.1} parent=1 // pred_check_branch
      %34 = sbr.rel (0) target = $region13
    $region12: #{tpu_custom_call.1} parent=1 // pred_region
      %s36 = ssub.s32 256, 256
      %37 = vsyncadd [#allocation6], %s36
      %s39 = sshll.u32 [#allocation7], 4
      %s40 = int_to_ptr.vmem [resolvable:$true] %s39
      %42 = dma.hbm_to_vmem [thread:$0]  %s2, 256, %s40, [#allocation6]
    $region13: #{tpu_custom_call.1} parent=1 // pred_fallthru
      _
    // Predicated region
    $region14: #{tpu_custom_call.1} parent=1 // pred_check
      _
    $region15: #{tpu_custom_call.1} parent=1 // pred_check_branch
      %44 = sbr.rel (0) target = $region17
    $region16: #{tpu_custom_call.1} parent=1 // pred_region
      %45 = dma.done [#allocation3], 128
    $region17: #{tpu_custom_call.1} parent=1 // pred_fallthru
      _
    // Predicated region
    $region18: #{tpu_custom_call.1} parent=1 // pred_check
      _
    $region19: #{tpu_custom_call.1} parent=1 // pred_check_branch
      %47 = sbr.rel (0) target = $region21
    $region20: #{tpu_custom_call.1} parent=1 // pred_region
      %48 = dma.done [#allocation6], 4096
    $region21: #{tpu_custom_call.1} parent=1 // pred_fallthru
      _
    // Predicated region
    $region22: #{tpu_custom_call.1} parent=1 // pred_check
      _
    $region23: #{tpu_custom_call.1} parent=1 // pred_check_branch
      %50 = sbr.rel (0) target = $region25
    $region24: #{tpu_custom_call.1} parent=1 // pred_region
      %51 = dma.done [#allocation6], 256
    $region25: #{tpu_custom_call.1} parent=1 // pred_fallthru
      _
    %v52 = vld [vmem:[#allocation2] sm:$0xff]
    %v53 = vld [vmem:[#allocation5] sm:$0xff]
    %v54 = vld [vmem:[#allocation5 + $0x8] sm:$0xff]
    %v55 = vld [vmem:[#allocation5 + $0x10] sm:$0xff]
    %v56 = vld [vmem:[#allocation5 + $0x18] sm:$0xff]
    %v57 = vld [vmem:[#allocation5 + $0x20] sm:$0xff]
    %v58 = vld [vmem:[#allocation5 + $0x28] sm:$0xff]
    %v59 = vld [vmem:[#allocation5 + $0x30] sm:$0xff]
    %v60 = vld [vmem:[#allocation5 + $0x38] sm:$0xff]
    %v61 = vld [vmem:[#allocation5 + $0x40] sm:$0xff]
    %v62 = vld [vmem:[#allocation5 + $0x48] sm:$0xff]
    %v63 = vld [vmem:[#allocation5 + $0x50] sm:$0xff]
    %v64 = vld [vmem:[#allocation5 + $0x58] sm:$0xff]
    %v65 = vld [vmem:[#allocation5 + $0x60] sm:$0xff]
    %v66 = vld [vmem:[#allocation5 + $0x68] sm:$0xff]
    %v67 = vld [vmem:[#allocation5 + $0x70] sm:$0xff]
    %v68 = vld [vmem:[#allocation5 + $0x78] sm:$0xff]
    %v69 = vld [vmem:[#allocation5 + $0x80] sm:$0xff]
    %v70 = vld [vmem:[#allocation5 + $0x88] sm:$0xff]
    %v71 = vld [vmem:[#allocation5 + $0x90] sm:$0xff]
    %v72 = vld [vmem:[#allocation5 + $0x98] sm:$0xff]
    %v73 = vld [vmem:[#allocation5 + $0xa0] sm:$0xff]
    %v74 = vld [vmem:[#allocation5 + $0xa8] sm:$0xff]
    %v75 = vld [vmem:[#allocation5 + $0xb0] sm:$0xff]
    %v76 = vld [vmem:[#allocation5 + $0xb8] sm:$0xff]
    %v77 = vld [vmem:[#allocation5 + $0xc0] sm:$0xff]
    %v78 = vld [vmem:[#allocation5 + $0xc8] sm:$0xff]
    %v79 = vld [vmem:[#allocation5 + $0xd0] sm:$0xff]
    %v80 = vld [vmem:[#allocation5 + $0xd8] sm:$0xff]
    %v81 = vld [vmem:[#allocation5 + $0xe0] sm:$0xff]
    %v82 = vld [vmem:[#allocation5 + $0xe8] sm:$0xff]
    %v83 = vld [vmem:[#allocation5 + $0xf0] sm:$0xff]
    %v84 = vld [vmem:[#allocation5 + $0xf8] sm:$0xff]
    %v85 = vld [vmem:[#allocation7] sm:$0xff]
    %v86 = vld [vmem:[#allocation7 + $0x8] sm:$0xff]
    %v87 = vand.u32 %v54, 4294901760
    %88 = vmatprep.subr.mxu0 %v87
    %v89 = vand.u32 %v53, 4294901760
    %90 = vmatpush1.msra.mxu0 %v89
    %v91 = vand.u32 %v56, 4294901760
    %92 = vmatprep.subr.mxu0 %v91
    %v93 = vand.u32 %v55, 4294901760
    %94 = vmatpush1.msra.mxu0 %v93
    %v95 = vand.u32 %v58, 4294901760
    %96 = vmatprep.subr.mxu0 %v95
    %v97 = vand.u32 %v57, 4294901760
    %98 = vmatpush1.msra.mxu0 %v97
    %v99 = vand.u32 %v60, 4294901760
    %100 = vmatprep.subr.mxu0 %v99
    %v101 = vand.u32 %v59, 4294901760
    %102 = vmatpush1.msra.mxu0 %v101
    %v103 = vand.u32 %v62, 4294901760
    %104 = vmatprep.subr.mxu0 %v103
    %v105 = vand.u32 %v61, 4294901760
    %106 = vmatpush1.msra.mxu0 %v105
    %v107 = vand.u32 %v64, 4294901760
    %108 = vmatprep.subr.mxu0 %v107
    %v109 = vand.u32 %v63, 4294901760
    %110 = vmatpush1.msra.mxu0 %v109
    %v111 = vand.u32 %v66, 4294901760
    %112 = vmatprep.subr.mxu0 %v111
    %v113 = vand.u32 %v65, 4294901760
    %114 = vmatpush1.msra.mxu0 %v113
    %v115 = vand.u32 %v68, 4294901760
    %116 = vmatprep.subr.mxu0 %v115
    %v117 = vand.u32 %v67, 4294901760
    %118 = vmatpush1.msra.mxu0 %v117
    %v119 = vand.u32 %v70, 4294901760
    %120 = vmatprep.subr.mxu0 %v119
    %v121 = vand.u32 %v69, 4294901760
    %122 = vmatpush1.msra.mxu0 %v121
    %v123 = vand.u32 %v72, 4294901760
    %124 = vmatprep.subr.mxu0 %v123
    %v125 = vand.u32 %v71, 4294901760
    %126 = vmatpush1.msra.mxu0 %v125
    %v127 = vand.u32 %v74, 4294901760
    %128 = vmatprep.subr.mxu0 %v127
    %v129 = vand.u32 %v73, 4294901760
    %130 = vmatpush1.msra.mxu0 %v129
    %v131 = vand.u32 %v76, 4294901760
    %132 = vmatprep.subr.mxu0 %v131
    %v133 = vand.u32 %v75, 4294901760
    %134 = vmatpush1.msra.mxu0 %v133
    %v135 = vand.u32 %v78, 4294901760
    %136 = vmatprep.subr.mxu0 %v135
    %v137 = vand.u32 %v77, 4294901760
    %138 = vmatpush1.msra.mxu0 %v137
    %v139 = vand.u32 %v80, 4294901760
    %140 = vmatprep.subr.mxu0 %v139
    %v141 = vand.u32 %v79, 4294901760
    %142 = vmatpush1.msra.mxu0 %v141
    %v143 = vand.u32 %v82, 4294901760
    %144 = vmatprep.subr.mxu0 %v143
    %v145 = vand.u32 %v81, 4294901760
    %146 = vmatpush1.msra.mxu0 %v145
    %v147 = vand.u32 %v84, 4294901760
    %148 = vmatprep.subr.mxu0 %v147
    %v149 = vand.u32 %v83, 4294901760
    %150 = vmatpush1.msra.mxu0 %v149
    %151 = vmatprep.subr.mxu0 0.0
    %152 = vmatpush1.msra.mxu0 0.0
    %153 = vmatprep.subr.mxu0 0.0
    %154 = vmatpush1.msra.mxu0 0.0
    %155 = vmatprep.subr.mxu0 0.0
    %156 = vmatpush1.msra.mxu0 0.0
    %157 = vmatprep.subr.mxu0 0.0
    %158 = vmatpush1.msra.mxu0 0.0
    %159 = vmatprep.subr.mxu0 0.0
    %160 = vmatpush1.msra.mxu0 0.0
    %161 = vmatprep.subr.mxu0 0.0
    %162 = vmatpush1.msra.mxu0 0.0
    %163 = vmatprep.subr.mxu0 0.0
    %164 = vmatpush1.msra.mxu0 0.0
    %165 = vmatprep.subr.mxu0 0.0
    %166 = vmatpush1.msra.mxu0 0.0
    %167 = vmatprep.subr.mxu0 0.0
    %168 = vmatpush1.msra.mxu0 0.0
    %169 = vmatprep.subr.mxu0 0.0
    %170 = vmatpush1.msra.mxu0 0.0
    %171 = vmatprep.subr.mxu0 0.0
    %172 = vmatpush1.msra.mxu0 0.0
    %173 = vmatprep.subr.mxu0 0.0
    %174 = vmatpush1.msra.mxu0 0.0
    %175 = vmatprep.subr.mxu0 0.0
    %176 = vmatpush1.msra.mxu0 0.0
    %177 = vmatprep.subr.mxu0 0.0
    %178 = vmatpush1.msra.mxu0 0.0
    %179 = vmatprep.subr.mxu0 0.0
    %180 = vmatpush1.msra.mxu0 0.0
    %181 = vmatprep.subr.mxu0 0.0
    %182 = vmatpush1.msra.mxu0 0.0
    %183 = vmatprep.mubr.f32.mxu0 0.0
    %v184 = vand.u32 %v52, 4294901760
    %v185 = vsub.f32 %v52, %v184
    %v186 = vand.u32 %v185, 4294901760
    %v187 = vsub.f32 %v185, %v186
    %v188 = vand.u32 %v187, 4294901760
    %189 = vmatmul.mubr.f32.gmra.mrb[0].mxu0 %v188
    %v190 = vpop.f32.mrb[0].mxu0
    %v191 = vadd.f32 %v85, %v190
    %v192 = vpop.f32.mrb[0].mxu0
    %v193 = vadd.f32 %v86, %v192
    %194 = vdwg.mxu0
    %v195 = vand.u32 %v54, 4294901760
    %v196 = vsub.f32 %v54, %v195
    %v197 = vand.u32 %v196, 4294901760
    %v198 = vsub.f32 %v196, %v197
    %v199 = vand.u32 %v198, 4294901760
    %200 = vmatprep.subr.mxu0 %v199
    %v201 = vand.u32 %v53, 4294901760
    %v202 = vsub.f32 %v53, %v201
    %v203 = vand.u32 %v202, 4294901760
    %v204 = vsub.f32 %v202, %v203
    %v205 = vand.u32 %v204, 4294901760
    %206 = vmatpush1.msra.mxu0 %v205
    %v207 = vand.u32 %v56, 4294901760
    %v208 = vsub.f32 %v56, %v207
    %v209 = vand.u32 %v208, 4294901760
    %v210 = vsub.f32 %v208, %v209
    %v211 = vand.u32 %v210, 4294901760
    %212 = vmatprep.subr.mxu0 %v211
    %v213 = vand.u32 %v55, 4294901760
    %v214 = vsub.f32 %v55, %v213
    %v215 = vand.u32 %v214, 4294901760
    %v216 = vsub.f32 %v214, %v215
    %v217 = vand.u32 %v216, 4294901760
    %218 = vmatpush1.msra.mxu0 %v217
    %v219 = vand.u32 %v58, 4294901760
    %v220 = vsub.f32 %v58, %v219
    %v221 = vand.u32 %v220, 4294901760
    %v222 = vsub.f32 %v220, %v221
    %v223 = vand.u32 %v222, 4294901760
    %224 = vmatprep.subr.mxu0 %v223
    %v225 = vand.u32 %v57, 4294901760
    %v226 = vsub.f32 %v57, %v225
    %v227 = vand.u32 %v226, 4294901760
    %v228 = vsub.f32 %v226, %v227
    %v229 = vand.u32 %v228, 4294901760
    %230 = vmatpush1.msra.mxu0 %v229
    %v231 = vand.u32 %v60, 4294901760
    %v232 = vsub.f32 %v60, %v231
    %v233 = vand.u32 %v232, 4294901760
    %v234 = vsub.f32 %v232, %v233
    %v235 = vand.u32 %v234, 4294901760
    %236 = vmatprep.subr.mxu0 %v235
    %v237 = vand.u32 %v59, 4294901760
    %v238 = vsub.f32 %v59, %v237
    %v239 = vand.u32 %v238, 4294901760
    %v240 = vsub.f32 %v238, %v239
    %v241 = vand.u32 %v240, 4294901760
    %242 = vmatpush1.msra.mxu0 %v241
    %v243 = vand.u32 %v62, 4294901760
    %v244 = vsub.f32 %v62, %v243
    %v245 = vand.u32 %v244, 4294901760
    %v246 = vsub.f32 %v244, %v245
    %v247 = vand.u32 %v246, 4294901760
    %248 = vmatprep.subr.mxu0 %v247
    %v249 = vand.u32 %v61, 4294901760
    %v250 = vsub.f32 %v61, %v249
    %v251 = vand.u32 %v250, 4294901760
    %v252 = vsub.f32 %v250, %v251
    %v253 = vand.u32 %v252, 4294901760
    %254 = vmatpush1.msra.mxu0 %v253
    %v255 = vand.u32 %v64, 4294901760
    %v256 = vsub.f32 %v64, %v255
    %v257 = vand.u32 %v256, 4294901760
    %v258 = vsub.f32 %v256, %v257
    %v259 = vand.u32 %v258, 4294901760
    %260 = vmatprep.subr.mxu0 %v259
    %v261 = vand.u32 %v63, 4294901760
    %v262 = vsub.f32 %v63, %v261
    %v263 = vand.u32 %v262, 4294901760
    %v264 = vsub.f32 %v262, %v263
    %v265 = vand.u32 %v264, 4294901760
    %266 = vmatpush1.msra.mxu0 %v265
    %v267 = vand.u32 %v66, 4294901760
    %v268 = vsub.f32 %v66, %v267
    %v269 = vand.u32 %v268, 4294901760
    %v270 = vsub.f32 %v268, %v269
    %v271 = vand.u32 %v270, 4294901760
    %272 = vmatprep.subr.mxu0 %v271
    %v273 = vand.u32 %v65, 4294901760
    %v274 = vsub.f32 %v65, %v273
    %v275 = vand.u32 %v274, 4294901760
    %v276 = vsub.f32 %v274, %v275
    %v277 = vand.u32 %v276, 4294901760
    %278 = vmatpush1.msra.mxu0 %v277
    %v279 = vand.u32 %v68, 4294901760
    %v280 = vsub.f32 %v68, %v279
    %v281 = vand.u32 %v280, 4294901760
    %v282 = vsub.f32 %v280, %v281
    %v283 = vand.u32 %v282, 4294901760
    %284 = vmatprep.subr.mxu0 %v283
    %v285 = vand.u32 %v67, 4294901760
    %v286 = vsub.f32 %v67, %v285
    %v287 = vand.u32 %v286, 4294901760
    %v288 = vsub.f32 %v286, %v287
    %v289 = vand.u32 %v288, 4294901760
    %290 = vmatpush1.msra.mxu0 %v289
    %v291 = vand.u32 %v70, 4294901760
    %v292 = vsub.f32 %v70, %v291
    %v293 = vand.u32 %v292, 4294901760
    %v294 = vsub.f32 %v292, %v293
    %v295 = vand.u32 %v294, 4294901760
    %296 = vmatprep.subr.mxu0 %v295
    %v297 = vand.u32 %v69, 4294901760
    %v298 = vsub.f32 %v69, %v297
    %v299 = vand.u32 %v298, 4294901760
    %v300 = vsub.f32 %v298, %v299
    %v301 = vand.u32 %v300, 4294901760
    %302 = vmatpush1.msra.mxu0 %v301
    %v303 = vand.u32 %v72, 4294901760
    %v304 = vsub.f32 %v72, %v303
    %v305 = vand.u32 %v304, 4294901760
    %v306 = vsub.f32 %v304, %v305
    %v307 = vand.u32 %v306, 4294901760
    %308 = vmatprep.subr.mxu0 %v307
    %v309 = vand.u32 %v71, 4294901760
    %v310 = vsub.f32 %v71, %v309
    %v311 = vand.u32 %v310, 4294901760
    %v312 = vsub.f32 %v310, %v311
    %v313 = vand.u32 %v312, 4294901760
    %314 = vmatpush1.msra.mxu0 %v313
    %v315 = vand.u32 %v74, 4294901760
    %v316 = vsub.f32 %v74, %v315
    %v317 = vand.u32 %v316, 4294901760
    %v318 = vsub.f32 %v316, %v317
    %v319 = vand.u32 %v318, 4294901760
    %320 = vmatprep.subr.mxu0 %v319
    %v321 = vand.u32 %v73, 4294901760
    %v322 = vsub.f32 %v73, %v321
    %v323 = vand.u32 %v322, 4294901760
    %v324 = vsub.f32 %v322, %v323
    %v325 = vand.u32 %v324, 4294901760
    %326 = vmatpush1.msra.mxu0 %v325
    %v327 = vand.u32 %v76, 4294901760
    %v328 = vsub.f32 %v76, %v327
    %v329 = vand.u32 %v328, 4294901760
    %v330 = vsub.f32 %v328, %v329
    %v331 = vand.u32 %v330, 4294901760
    %332 = vmatprep.subr.mxu0 %v331
    %v333 = vand.u32 %v75, 4294901760
    %v334 = vsub.f32 %v75, %v333
    %v335 = vand.u32 %v334, 4294901760
    %v336 = vsub.f32 %v334, %v335
    %v337 = vand.u32 %v336, 4294901760
    %338 = vmatpush1.msra.mxu0 %v337
    %v339 = vand.u32 %v78, 4294901760
    %v340 = vsub.f32 %v78, %v339
    %v341 = vand.u32 %v340, 4294901760
    %v342 = vsub.f32 %v340, %v341
    %v343 = vand.u32 %v342, 4294901760
    %344 = vmatprep.subr.mxu0 %v343
    %v345 = vand.u32 %v77, 4294901760
    %v346 = vsub.f32 %v77, %v345
    %v347 = vand.u32 %v346, 4294901760
    %v348 = vsub.f32 %v346, %v347
    %v349 = vand.u32 %v348, 4294901760
    %350 = vmatpush1.msra.mxu0 %v349
    %v351 = vand.u32 %v80, 4294901760
    %v352 = vsub.f32 %v80, %v351
    %v353 = vand.u32 %v352, 4294901760
    %v354 = vsub.f32 %v352, %v353
    %v355 = vand.u32 %v354, 4294901760
    %356 = vmatprep.subr.mxu0 %v355
    %v357 = vand.u32 %v79, 4294901760
    %v358 = vsub.f32 %v79, %v357
    %v359 = vand.u32 %v358, 4294901760
    %v360 = vsub.f32 %v358, %v359
    %v361 = vand.u32 %v360, 4294901760
    %362 = vmatpush1.msra.mxu0 %v361
    %v363 = vand.u32 %v82, 4294901760
    %v364 = vsub.f32 %v82, %v363
    %v365 = vand.u32 %v364, 4294901760
    %v366 = vsub.f32 %v364, %v365
    %v367 = vand.u32 %v366, 4294901760
    %368 = vmatprep.subr.mxu0 %v367
    %v369 = vand.u32 %v81, 4294901760
    %v370 = vsub.f32 %v81, %v369
    %v371 = vand.u32 %v370, 4294901760
    %v372 = vsub.f32 %v370, %v371
    %v373 = vand.u32 %v372, 4294901760
    %374 = vmatpush1.msra.mxu0 %v373
    %v375 = vand.u32 %v84, 4294901760
    %v376 = vsub.f32 %v84, %v375
    %v377 = vand.u32 %v376, 4294901760
    %v378 = vsub.f32 %v376, %v377
    %v379 = vand.u32 %v378, 4294901760
    %380 = vmatprep.subr.mxu0 %v379
    %v381 = vand.u32 %v83, 4294901760
    %v382 = vsub.f32 %v83, %v381
    %v383 = vand.u32 %v382, 4294901760
    %v384 = vsub.f32 %v382, %v383
    %v385 = vand.u32 %v384, 4294901760
    %386 = vmatpush1.msra.mxu0 %v385
    %387 = vmatprep.subr.mxu0 0.0
    %388 = vmatpush1.msra.mxu0 0.0
    %389 = vmatprep.subr.mxu0 0.0
    %390 = vmatpush1.msra.mxu0 0.0
    %391 = vmatprep.subr.mxu0 0.0
    %392 = vmatpush1.msra.mxu0 0.0
    %393 = vmatprep.subr.mxu0 0.0
    %394 = vmatpush1.msra.mxu0 0.0
    %395 = vmatprep.subr.mxu0 0.0
    %396 = vmatpush1.msra.mxu0 0.0
    %397 = vmatprep.subr.mxu0 0.0
    %398 = vmatpush1.msra.mxu0 0.0
    %399 = vmatprep.subr.mxu0 0.0
    %400 = vmatpush1.msra.mxu0 0.0
    %401 = vmatprep.subr.mxu0 0.0
    %402 = vmatpush1.msra.mxu0 0.0
    %403 = vmatprep.subr.mxu0 0.0
    %404 = vmatpush1.msra.mxu0 0.0
    %405 = vmatprep.subr.mxu0 0.0
    %406 = vmatpush1.msra.mxu0 0.0
    %407 = vmatprep.subr.mxu0 0.0
    %408 = vmatpush1.msra.mxu0 0.0
    %409 = vmatprep.subr.mxu0 0.0
    %410 = vmatpush1.msra.mxu0 0.0
    %411 = vmatprep.subr.mxu0 0.0
    %412 = vmatpush1.msra.mxu0 0.0
    %413 = vmatprep.subr.mxu0 0.0
    %414 = vmatpush1.msra.mxu0 0.0
    %415 = vmatprep.subr.mxu0 0.0
    %416 = vmatpush1.msra.mxu0 0.0
    %417 = vmatprep.subr.mxu0 0.0
    %418 = vmatpush1.msra.mxu0 0.0
    %419 = vmatprep.mubr.f32.mxu0 0.0
    %v420 = vand.u32 %v52, 4294901760
    %421 = vmatmul.mubr.f32.gmra.mrb[0].mxu0 %v420
    %v422 = vpop.f32.mrb[0].mxu0
    %v423 = vadd.f32 %v191, %v422
    %v424 = vpop.f32.mrb[0].mxu0
    %v425 = vadd.f32 %v193, %v424
    %426 = vdwg.mxu0
    %v427 = vand.u32 %v54, 4294901760
    %v428 = vsub.f32 %v54, %v427
    %429 = vmatprep.subr.mxu0 %v428
    %v430 = vand.u32 %v53, 4294901760
    %v431 = vsub.f32 %v53, %v430
    %432 = vmatpush1.msra.mxu0 %v431
    %v433 = vand.u32 %v56, 4294901760
    %v434 = vsub.f32 %v56, %v433
    %435 = vmatprep.subr.mxu0 %v434
    %v436 = vand.u32 %v55, 4294901760
    %v437 = vsub.f32 %v55, %v436
    %438 = vmatpush1.msra.mxu0 %v437
    %v439 = vand.u32 %v58, 4294901760
    %v440 = vsub.f32 %v58, %v439
    %441 = vmatprep.subr.mxu0 %v440
    %v442 = vand.u32 %v57, 4294901760
    %v443 = vsub.f32 %v57, %v442
    %444 = vmatpush1.msra.mxu0 %v443
    %v445 = vand.u32 %v60, 4294901760
    %v446 = vsub.f32 %v60, %v445
    %447 = vmatprep.subr.mxu0 %v446
    %v448 = vand.u32 %v59, 4294901760
    %v449 = vsub.f32 %v59, %v448
    %450 = vmatpush1.msra.mxu0 %v449
    %v451 = vand.u32 %v62, 4294901760
    %v452 = vsub.f32 %v62, %v451
    %453 = vmatprep.subr.mxu0 %v452
    %v454 = vand.u32 %v61, 4294901760
    %v455 = vsub.f32 %v61, %v454
    %456 = vmatpush1.msra.mxu0 %v455
    %v457 = vand.u32 %v64, 4294901760
    %v458 = vsub.f32 %v64, %v457
    %459 = vmatprep.subr.mxu0 %v458
    %v460 = vand.u32 %v63, 4294901760
    %v461 = vsub.f32 %v63, %v460
    %462 = vmatpush1.msra.mxu0 %v461
    %v463 = vand.u32 %v66, 4294901760
    %v464 = vsub.f32 %v66, %v463
    %465 = vmatprep.subr.mxu0 %v464
    %v466 = vand.u32 %v65, 4294901760
    %v467 = vsub.f32 %v65, %v466
    %468 = vmatpush1.msra.mxu0 %v467
    %v469 = vand.u32 %v68, 4294901760
    %v470 = vsub.f32 %v68, %v469
    %471 = vmatprep.subr.mxu0 %v470
    %v472 = vand.u32 %v67, 4294901760
    %v473 = vsub.f32 %v67, %v472
    %474 = vmatpush1.msra.mxu0 %v473
    %v475 = vand.u32 %v70, 4294901760
    %v476 = vsub.f32 %v70, %v475
    %477 = vmatprep.subr.mxu0 %v476
    %v478 = vand.u32 %v69, 4294901760
    %v479 = vsub.f32 %v69, %v478
    %480 = vmatpush1.msra.mxu0 %v479
    %v481 = vand.u32 %v72, 4294901760
    %v482 = vsub.f32 %v72, %v481
    %483 = vmatprep.subr.mxu0 %v482
    %v484 = vand.u32 %v71, 4294901760
    %v485 = vsub.f32 %v71, %v484
    %486 = vmatpush1.msra.mxu0 %v485
    %v487 = vand.u32 %v74, 4294901760
    %v488 = vsub.f32 %v74, %v487
    %489 = vmatprep.subr.mxu0 %v488
    %v490 = vand.u32 %v73, 4294901760
    %v491 = vsub.f32 %v73, %v490
    %492 = vmatpush1.msra.mxu0 %v491
    %v493 = vand.u32 %v76, 4294901760
    %v494 = vsub.f32 %v76, %v493
    %495 = vmatprep.subr.mxu0 %v494
    %v496 = vand.u32 %v75, 4294901760
    %v497 = vsub.f32 %v75, %v496
    %498 = vmatpush1.msra.mxu0 %v497
    %v499 = vand.u32 %v78, 4294901760
    %v500 = vsub.f32 %v78, %v499
    %501 = vmatprep.subr.mxu0 %v500
    %v502 = vand.u32 %v77, 4294901760
    %v503 = vsub.f32 %v77, %v502
    %504 = vmatpush1.msra.mxu0 %v503
    %v505 = vand.u32 %v80, 4294901760
    %v506 = vsub.f32 %v80, %v505
    %507 = vmatprep.subr.mxu0 %v506
    %v508 = vand.u32 %v79, 4294901760
    %v509 = vsub.f32 %v79, %v508
    %510 = vmatpush1.msra.mxu0 %v509
    %v511 = vand.u32 %v82, 4294901760
    %v512 = vsub.f32 %v82, %v511
    %513 = vmatprep.subr.mxu0 %v512
    %v514 = vand.u32 %v81, 4294901760
    %v515 = vsub.f32 %v81, %v514
    %516 = vmatpush1.msra.mxu0 %v515
    %v517 = vand.u32 %v84, 4294901760
    %v518 = vsub.f32 %v84, %v517
    %519 = vmatprep.subr.mxu0 %v518
    %v520 = vand.u32 %v83, 4294901760
    %v521 = vsub.f32 %v83, %v520
    %522 = vmatpush1.msra.mxu0 %v521
    %523 = vmatprep.subr.mxu0 0.0
    %524 = vmatpush1.msra.mxu0 0.0
    %525 = vmatprep.subr.mxu0 0.0
    %526 = vmatpush1.msra.mxu0 0.0
    %527 = vmatprep.subr.mxu0 0.0
    %528 = vmatpush1.msra.mxu0 0.0
    %529 = vmatprep.subr.mxu0 0.0
    %530 = vmatpush1.msra.mxu0 0.0
    %531 = vmatprep.subr.mxu0 0.0
    %532 = vmatpush1.msra.mxu0 0.0
    %533 = vmatprep.subr.mxu0 0.0
    %534 = vmatpush1.msra.mxu0 0.0
    %535 = vmatprep.subr.mxu0 0.0
    %536 = vmatpush1.msra.mxu0 0.0
    %537 = vmatprep.subr.mxu0 0.0
    %538 = vmatpush1.msra.mxu0 0.0
    %539 = vmatprep.subr.mxu0 0.0
    %540 = vmatpush1.msra.mxu0 0.0
    %541 = vmatprep.subr.mxu0 0.0
    %542 = vmatpush1.msra.mxu0 0.0
    %543 = vmatprep.subr.mxu0 0.0
    %544 = vmatpush1.msra.mxu0 0.0
    %545 = vmatprep.subr.mxu0 0.0
    %546 = vmatpush1.msra.mxu0 0.0
    %547 = vmatprep.subr.mxu0 0.0
    %548 = vmatpush1.msra.mxu0 0.0
    %549 = vmatprep.subr.mxu0 0.0
    %550 = vmatpush1.msra.mxu0 0.0
    %551 = vmatprep.subr.mxu0 0.0
    %552 = vmatpush1.msra.mxu0 0.0
    %553 = vmatprep.subr.mxu0 0.0
    %554 = vmatpush1.msra.mxu0 0.0
    %555 = vmatprep.mubr.f32.mxu0 0.0
    %v556 = vand.u32 %v52, 4294901760
    %v557 = vsub.f32 %v52, %v556
    %558 = vmatmul.mubr.f32.gmra.mrb[0].mxu0 %v557
    %v559 = vpop.f32.mrb[0].mxu0
    %v560 = vadd.f32 %v423, %v559
    %v561 = vpop.f32.mrb[0].mxu0
    %v562 = vadd.f32 %v425, %v561
    %563 = vdwg.mxu0
    %v564 = vand.u32 %v54, 4294901760
    %565 = vmatprep.subr.mxu0 %v564
    %v566 = vand.u32 %v53, 4294901760
    %567 = vmatpush1.msra.mxu0 %v566
    %v568 = vand.u32 %v56, 4294901760
    %569 = vmatprep.subr.mxu0 %v568
    %v570 = vand.u32 %v55, 4294901760
    %571 = vmatpush1.msra.mxu0 %v570
    %v572 = vand.u32 %v58, 4294901760
    %573 = vmatprep.subr.mxu0 %v572
    %v574 = vand.u32 %v57, 4294901760
    %575 = vmatpush1.msra.mxu0 %v574
    %v576 = vand.u32 %v60, 4294901760
    %577 = vmatprep.subr.mxu0 %v576
    %v578 = vand.u32 %v59, 4294901760
    %579 = vmatpush1.msra.mxu0 %v578
    %v580 = vand.u32 %v62, 4294901760
    %581 = vmatprep.subr.mxu0 %v580
    %v582 = vand.u32 %v61, 4294901760
    %583 = vmatpush1.msra.mxu0 %v582
    %v584 = vand.u32 %v64, 4294901760
    %585 = vmatprep.subr.mxu0 %v584
    %v586 = vand.u32 %v63, 4294901760
    %587 = vmatpush1.msra.mxu0 %v586
    %v588 = vand.u32 %v66, 4294901760
    %589 = vmatprep.subr.mxu0 %v588
    %v590 = vand.u32 %v65, 4294901760
    %591 = vmatpush1.msra.mxu0 %v590
    %v592 = vand.u32 %v68, 4294901760
    %593 = vmatprep.subr.mxu0 %v592
    %v594 = vand.u32 %v67, 4294901760
    %595 = vmatpush1.msra.mxu0 %v594
    %v596 = vand.u32 %v70, 4294901760
    %597 = vmatprep.subr.mxu0 %v596
    %v598 = vand.u32 %v69, 4294901760
    %599 = vmatpush1.msra.mxu0 %v598
    %v600 = vand.u32 %v72, 4294901760
    %601 = vmatprep.subr.mxu0 %v600
    %v602 = vand.u32 %v71, 4294901760
    %603 = vmatpush1.msra.mxu0 %v602
    %v604 = vand.u32 %v74, 4294901760
    %605 = vmatprep.subr.mxu0 %v604
    %v606 = vand.u32 %v73, 4294901760
    %607 = vmatpush1.msra.mxu0 %v606
    %v608 = vand.u32 %v76, 4294901760
    %609 = vmatprep.subr.mxu0 %v608
    %v610 = vand.u32 %v75, 4294901760
    %611 = vmatpush1.msra.mxu0 %v610
    %v612 = vand.u32 %v78, 4294901760
    %613 = vmatprep.subr.mxu0 %v612
    %v614 = vand.u32 %v77, 4294901760
    %615 = vmatpush1.msra.mxu0 %v614
    %v616 = vand.u32 %v80, 4294901760
    %617 = vmatprep.subr.mxu0 %v616
    %v618 = vand.u32 %v79, 4294901760
    %619 = vmatpush1.msra.mxu0 %v618
    %v620 = vand.u32 %v82, 4294901760
    %621 = vmatprep.subr.mxu0 %v620
    %v622 = vand.u32 %v81, 4294901760
    %623 = vmatpush1.msra.mxu0 %v622
    %v624 = vand.u32 %v84, 4294901760
    %625 = vmatprep.subr.mxu0 %v624
    %v626 = vand.u32 %v83, 4294901760
    %627 = vmatpush1.msra.mxu0 %v626
    %628 = vmatprep.subr.mxu0 0.0
    %629 = vmatpush1.msra.mxu0 0.0
    %630 = vmatprep.subr.mxu0 0.0
    %631 = vmatpush1.msra.mxu0 0.0
    %632 = vmatprep.subr.mxu0 0.0
    %633 = vmatpush1.msra.mxu0 0.0
    %634 = vmatprep.subr.mxu0 0.0
    %635 = vmatpush1.msra.mxu0 0.0
    %636 = vmatprep.subr.mxu0 0.0
    %637 = vmatpush1.msra.mxu0 0.0
    %638 = vmatprep.subr.mxu0 0.0
    %639 = vmatpush1.msra.mxu0 0.0
    %640 = vmatprep.subr.mxu0 0.0
    %641 = vmatpush1.msra.mxu0 0.0
    %642 = vmatprep.subr.mxu0 0.0
    %643 = vmatpush1.msra.mxu0 0.0
    %644 = vmatprep.subr.mxu0 0.0
    %645 = vmatpush1.msra.mxu0 0.0
    %646 = vmatprep.subr.mxu0 0.0
    %647 = vmatpush1.msra.mxu0 0.0
    %648 = vmatprep.subr.mxu0 0.0
    %649 = vmatpush1.msra.mxu0 0.0
    %650 = vmatprep.subr.mxu0 0.0
    %651 = vmatpush1.msra.mxu0 0.0
    %652 = vmatprep.subr.mxu0 0.0
    %653 = vmatpush1.msra.mxu0 0.0
    %654 = vmatprep.subr.mxu0 0.0
    %655 = vmatpush1.msra.mxu0 0.0
    %656 = vmatprep.subr.mxu0 0.0
    %657 = vmatpush1.msra.mxu0 0.0
    %658 = vmatprep.subr.mxu0 0.0
    %659 = vmatpush1.msra.mxu0 0.0
    %660 = vmatprep.mubr.f32.mxu0 0.0
    %v661 = vand.u32 %v52, 4294901760
    %v662 = vsub.f32 %v52, %v661
    %v663 = vand.u32 %v662, 4294901760
    %664 = vmatmul.mubr.f32.gmra.mrb[0].mxu0 %v663
    %v665 = vpop.f32.mrb[0].mxu0
    %v666 = vadd.f32 %v560, %v665
    %v667 = vpop.f32.mrb[0].mxu0
    %v668 = vadd.f32 %v562, %v667
    %669 = vdwg.mxu0
    %v670 = vand.u32 %v54, 4294901760
    %v671 = vsub.f32 %v54, %v670
    %v672 = vand.u32 %v671, 4294901760
    %673 = vmatprep.subr.mxu0 %v672
    %v674 = vand.u32 %v53, 4294901760
    %v675 = vsub.f32 %v53, %v674
    %v676 = vand.u32 %v675, 4294901760
    %677 = vmatpush1.msra.mxu0 %v676
    %v678 = vand.u32 %v56, 4294901760
    %v679 = vsub.f32 %v56, %v678
    %v680 = vand.u32 %v679, 4294901760
    %681 = vmatprep.subr.mxu0 %v680
    %v682 = vand.u32 %v55, 4294901760
    %v683 = vsub.f32 %v55, %v682
    %v684 = vand.u32 %v683, 4294901760
    %685 = vmatpush1.msra.mxu0 %v684
    %v686 = vand.u32 %v58, 4294901760
    %v687 = vsub.f32 %v58, %v686
    %v688 = vand.u32 %v687, 4294901760
    %689 = vmatprep.subr.mxu0 %v688
    %v690 = vand.u32 %v57, 4294901760
    %v691 = vsub.f32 %v57, %v690
    %v692 = vand.u32 %v691, 4294901760
    %693 = vmatpush1.msra.mxu0 %v692
    %v694 = vand.u32 %v60, 4294901760
    %v695 = vsub.f32 %v60, %v694
    %v696 = vand.u32 %v695, 4294901760
    %697 = vmatprep.subr.mxu0 %v696
    %v698 = vand.u32 %v59, 4294901760
    %v699 = vsub.f32 %v59, %v698
    %v700 = vand.u32 %v699, 4294901760
    %701 = vmatpush1.msra.mxu0 %v700
    %v702 = vand.u32 %v62, 4294901760
    %v703 = vsub.f32 %v62, %v702
    %v704 = vand.u32 %v703, 4294901760
    %705 = vmatprep.subr.mxu0 %v704
    %v706 = vand.u32 %v61, 4294901760
    %v707 = vsub.f32 %v61, %v706
    %v708 = vand.u32 %v707, 4294901760
    %709 = vmatpush1.msra.mxu0 %v708
    %v710 = vand.u32 %v64, 4294901760
    %v711 = vsub.f32 %v64, %v710
    %v712 = vand.u32 %v711, 4294901760
    %713 = vmatprep.subr.mxu0 %v712
    %v714 = vand.u32 %v63, 4294901760
    %v715 = vsub.f32 %v63, %v714
    %v716 = vand.u32 %v715, 4294901760
    %717 = vmatpush1.msra.mxu0 %v716
    %v718 = vand.u32 %v66, 4294901760
    %v719 = vsub.f32 %v66, %v718
    %v720 = vand.u32 %v719, 4294901760
    %721 = vmatprep.subr.mxu0 %v720
    %v722 = vand.u32 %v65, 4294901760
    %v723 = vsub.f32 %v65, %v722
    %v724 = vand.u32 %v723, 4294901760
    %725 = vmatpush1.msra.mxu0 %v724
    %v726 = vand.u32 %v68, 4294901760
    %v727 = vsub.f32 %v68, %v726
    %v728 = vand.u32 %v727, 4294901760
    %729 = vmatprep.subr.mxu0 %v728
    %v730 = vand.u32 %v67, 4294901760
    %v731 = vsub.f32 %v67, %v730
    %v732 = vand.u32 %v731, 4294901760
    %733 = vmatpush1.msra.mxu0 %v732
    %v734 = vand.u32 %v70, 4294901760
    %v735 = vsub.f32 %v70, %v734
    %v736 = vand.u32 %v735, 4294901760
    %737 = vmatprep.subr.mxu0 %v736
    %v738 = vand.u32 %v69, 4294901760
    %v739 = vsub.f32 %v69, %v738
    %v740 = vand.u32 %v739, 4294901760
    %741 = vmatpush1.msra.mxu0 %v740
    %v742 = vand.u32 %v72, 4294901760
    %v743 = vsub.f32 %v72, %v742
    %v744 = vand.u32 %v743, 4294901760
    %745 = vmatprep.subr.mxu0 %v744
    %v746 = vand.u32 %v71, 4294901760
    %v747 = vsub.f32 %v71, %v746
    %v748 = vand.u32 %v747, 4294901760
    %749 = vmatpush1.msra.mxu0 %v748
    %v750 = vand.u32 %v74, 4294901760
    %v751 = vsub.f32 %v74, %v750
    %v752 = vand.u32 %v751, 4294901760
    %753 = vmatprep.subr.mxu0 %v752
    %v754 = vand.u32 %v73, 4294901760
    %v755 = vsub.f32 %v73, %v754
    %v756 = vand.u32 %v755, 4294901760
    %757 = vmatpush1.msra.mxu0 %v756
    %v758 = vand.u32 %v76, 4294901760
    %v759 = vsub.f32 %v76, %v758
    %v760 = vand.u32 %v759, 4294901760
    %761 = vmatprep.subr.mxu0 %v760
    %v762 = vand.u32 %v75, 4294901760
    %v763 = vsub.f32 %v75, %v762
    %v764 = vand.u32 %v763, 4294901760
    %765 = vmatpush1.msra.mxu0 %v764
    %v766 = vand.u32 %v78, 4294901760
    %v767 = vsub.f32 %v78, %v766
    %v768 = vand.u32 %v767, 4294901760
    %769 = vmatprep.subr.mxu0 %v768
    %v770 = vand.u32 %v77, 4294901760
    %v771 = vsub.f32 %v77, %v770
    %v772 = vand.u32 %v771, 4294901760
    %773 = vmatpush1.msra.mxu0 %v772
    %v774 = vand.u32 %v80, 4294901760
    %v775 = vsub.f32 %v80, %v774
    %v776 = vand.u32 %v775, 4294901760
    %777 = vmatprep.subr.mxu0 %v776
    %v778 = vand.u32 %v79, 4294901760
    %v779 = vsub.f32 %v79, %v778
    %v780 = vand.u32 %v779, 4294901760
    %781 = vmatpush1.msra.mxu0 %v780
    %v782 = vand.u32 %v82, 4294901760
    %v783 = vsub.f32 %v82, %v782
    %v784 = vand.u32 %v783, 4294901760
    %785 = vmatprep.subr.mxu0 %v784
    %v786 = vand.u32 %v81, 4294901760
    %v787 = vsub.f32 %v81, %v786
    %v788 = vand.u32 %v787, 4294901760
    %789 = vmatpush1.msra.mxu0 %v788
    %v790 = vand.u32 %v84, 4294901760
    %v791 = vsub.f32 %v84, %v790
    %v792 = vand.u32 %v791, 4294901760
    %793 = vmatprep.subr.mxu0 %v792
    %v794 = vand.u32 %v83, 4294901760
    %v795 = vsub.f32 %v83, %v794
    %v796 = vand.u32 %v795, 4294901760
    %797 = vmatpush1.msra.mxu0 %v796
    %798 = vmatprep.subr.mxu0 0.0
    %799 = vmatpush1.msra.mxu0 0.0
    %800 = vmatprep.subr.mxu0 0.0
    %801 = vmatpush1.msra.mxu0 0.0
    %802 = vmatprep.subr.mxu0 0.0
    %803 = vmatpush1.msra.mxu0 0.0
    %804 = vmatprep.subr.mxu0 0.0
    %805 = vmatpush1.msra.mxu0 0.0
    %806 = vmatprep.subr.mxu0 0.0
    %807 = vmatpush1.msra.mxu0 0.0
    %808 = vmatprep.subr.mxu0 0.0
    %809 = vmatpush1.msra.mxu0 0.0
    %810 = vmatprep.subr.mxu0 0.0
    %811 = vmatpush1.msra.mxu0 0.0
    %812 = vmatprep.subr.mxu0 0.0
    %813 = vmatpush1.msra.mxu0 0.0
    %814 = vmatprep.subr.mxu0 0.0
    %815 = vmatpush1.msra.mxu0 0.0
    %816 = vmatprep.subr.mxu0 0.0
    %817 = vmatpush1.msra.mxu0 0.0
    %818 = vmatprep.subr.mxu0 0.0
    %819 = vmatpush1.msra.mxu0 0.0
    %820 = vmatprep.subr.mxu0 0.0
    %821 = vmatpush1.msra.mxu0 0.0
    %822 = vmatprep.subr.mxu0 0.0
    %823 = vmatpush1.msra.mxu0 0.0
    %824 = vmatprep.subr.mxu0 0.0
    %825 = vmatpush1.msra.mxu0 0.0
    %826 = vmatprep.subr.mxu0 0.0
    %827 = vmatpush1.msra.mxu0 0.0
    %828 = vmatprep.subr.mxu0 0.0
    %829 = vmatpush1.msra.mxu0 0.0
    %830 = vmatprep.mubr.f32.mxu0 0.0
    %v831 = vand.u32 %v52, 4294901760
    %832 = vmatmul.mubr.f32.gmra.mrb[0].mxu0 %v831
    %v833 = vpop.f32.mrb[0].mxu0
    %v834 = vadd.f32 %v666, %v833
    %v835 = vpop.f32.mrb[0].mxu0
    %v836 = vadd.f32 %v668, %v835
    %837 = vdwg.mxu0
    %v838 = vand.u32 %v54, 4294901760
    %839 = vmatprep.subr.mxu0 %v838
    %v840 = vand.u32 %v53, 4294901760
    %841 = vmatpush1.msra.mxu0 %v840
    %v842 = vand.u32 %v56, 4294901760
    %843 = vmatprep.subr.mxu0 %v842
    %v844 = vand.u32 %v55, 4294901760
    %845 = vmatpush1.msra.mxu0 %v844
    %v846 = vand.u32 %v58, 4294901760
    %847 = vmatprep.subr.mxu0 %v846
    %v848 = vand.u32 %v57, 4294901760
    %849 = vmatpush1.msra.mxu0 %v848
    %v850 = vand.u32 %v60, 4294901760
    %851 = vmatprep.subr.mxu0 %v850
    %v852 = vand.u32 %v59, 4294901760
    %853 = vmatpush1.msra.mxu0 %v852
    %v854 = vand.u32 %v62, 4294901760
    %855 = vmatprep.subr.mxu0 %v854
    %v856 = vand.u32 %v61, 4294901760
    %857 = vmatpush1.msra.mxu0 %v856
    %v858 = vand.u32 %v64, 4294901760
    %859 = vmatprep.subr.mxu0 %v858
    %v860 = vand.u32 %v63, 4294901760
    %861 = vmatpush1.msra.mxu0 %v860
    %v862 = vand.u32 %v66, 4294901760
    %863 = vmatprep.subr.mxu0 %v862
    %v864 = vand.u32 %v65, 4294901760
    %865 = vmatpush1.msra.mxu0 %v864
    %v866 = vand.u32 %v68, 4294901760
    %867 = vmatprep.subr.mxu0 %v866
    %v868 = vand.u32 %v67, 4294901760
    %869 = vmatpush1.msra.mxu0 %v868
    %v870 = vand.u32 %v70, 4294901760
    %871 = vmatprep.subr.mxu0 %v870
    %v872 = vand.u32 %v69, 4294901760
    %873 = vmatpush1.msra.mxu0 %v872
    %v874 = vand.u32 %v72, 4294901760
    %875 = vmatprep.subr.mxu0 %v874
    %v876 = vand.u32 %v71, 4294901760
    %877 = vmatpush1.msra.mxu0 %v876
    %v878 = vand.u32 %v74, 4294901760
    %879 = vmatprep.subr.mxu0 %v878
    %v880 = vand.u32 %v73, 4294901760
    %881 = vmatpush1.msra.mxu0 %v880
    %v882 = vand.u32 %v76, 4294901760
    %883 = vmatprep.subr.mxu0 %v882
    %v884 = vand.u32 %v75, 4294901760
    %885 = vmatpush1.msra.mxu0 %v884
    %v886 = vand.u32 %v78, 4294901760
    %887 = vmatprep.subr.mxu0 %v886
    %v888 = vand.u32 %v77, 4294901760
    %889 = vmatpush1.msra.mxu0 %v888
    %v890 = vand.u32 %v80, 4294901760
    %891 = vmatprep.subr.mxu0 %v890
    %v892 = vand.u32 %v79, 4294901760
    %893 = vmatpush1.msra.mxu0 %v892
    %v894 = vand.u32 %v82, 4294901760
    %895 = vmatprep.subr.mxu0 %v894
    %v896 = vand.u32 %v81, 4294901760
    %897 = vmatpush1.msra.mxu0 %v896
    %v898 = vand.u32 %v84, 4294901760
    %899 = vmatprep.subr.mxu0 %v898
    %v900 = vand.u32 %v83, 4294901760
    %901 = vmatpush1.msra.mxu0 %v900
    %902 = vmatprep.subr.mxu0 0.0
    %903 = vmatpush1.msra.mxu0 0.0
    %904 = vmatprep.subr.mxu0 0.0
    %905 = vmatpush1.msra.mxu0 0.0
    %906 = vmatprep.subr.mxu0 0.0
    %907 = vmatpush1.msra.mxu0 0.0
    %908 = vmatprep.subr.mxu0 0.0
    %909 = vmatpush1.msra.mxu0 0.0
    %910 = vmatprep.subr.mxu0 0.0
    %911 = vmatpush1.msra.mxu0 0.0
    %912 = vmatprep.subr.mxu0 0.0
    %913 = vmatpush1.msra.mxu0 0.0
    %914 = vmatprep.subr.mxu0 0.0
    %915 = vmatpush1.msra.mxu0 0.0
    %916 = vmatprep.subr.mxu0 0.0
    %917 = vmatpush1.msra.mxu0 0.0
    %918 = vmatprep.subr.mxu0 0.0
    %919 = vmatpush1.msra.mxu0 0.0
    %920 = vmatprep.subr.mxu0 0.0
    %921 = vmatpush1.msra.mxu0 0.0
    %922 = vmatprep.subr.mxu0 0.0
    %923 = vmatpush1.msra.mxu0 0.0
    %924 = vmatprep.subr.mxu0 0.0
    %925 = vmatpush1.msra.mxu0 0.0
    %926 = vmatprep.subr.mxu0 0.0
    %927 = vmatpush1.msra.mxu0 0.0
    %928 = vmatprep.subr.mxu0 0.0
    %929 = vmatpush1.msra.mxu0 0.0
    %930 = vmatprep.subr.mxu0 0.0
    %931 = vmatpush1.msra.mxu0 0.0
    %932 = vmatprep.subr.mxu0 0.0
    %933 = vmatpush1.msra.mxu0 0.0
    %934 = vmatprep.mubr.f32.mxu0 0.0
    %v935 = vand.u32 %v52, 4294901760
    %936 = vmatmul.mubr.f32.gmra.mrb[0].mxu0 %v935
    %v937 = vpop.f32.mrb[0].mxu0
    %v938 = vadd.f32 %v834, %v937
    %v939 = vpop.f32.mrb[0].mxu0
    %v940 = vadd.f32 %v836, %v939
    %941 = vdwg.mxu0
    %942 = vst [vmem:[#allocation8] sm:$0xff] %v938
    %943 = vst [vmem:[#allocation8 + $0x8] sm:$0xff] %v940
    // Predicated region
    $region26: #{tpu_custom_call.1} parent=1 // pred_check
      _
    $region27: #{tpu_custom_call.1} parent=1 // pred_check_branch
      %945 = sbr.rel (0) target = $region29
    $region28: #{tpu_custom_call.1} parent=1 // pred_region
      %s947 = ssub.s32 256, 256
      %948 = vsyncadd [#allocation4], %s947
      %s950 = sshll.u32 [#allocation8], 4
      %s951 = int_to_ptr.vmem [resolvable:$true] %s950
      %953 = dma.vmem_to_hbm [thread:$0]  %s951, 256, %s3, [#allocation4]
    $region29: #{tpu_custom_call.1} parent=1 // pred_fallthru
      _
    // Predicated region
    $region30: #{tpu_custom_call.1} parent=1 // pred_check
      _
    $region31: #{tpu_custom_call.1} parent=1 // pred_check_branch
      %955 = sbr.rel (0) target = $region33
    $region32: #{tpu_custom_call.1} parent=1 // pred_region
      %956 = dma.done [#allocation4], 256
    $region33: #{tpu_custom_call.1} parent=1 // pred_fallthru
      _
    %957 = vsyncpa [#allocation3], 1
    %958 = vsyncpa [#allocation6], 1
    %959 = vsyncpa [#allocation4], 1

</llo_original>
